<compile_context>
chip_gen: v7x
topology: tpu7x:2x2x1
jax: 0.10.0
libtpu: 0.0.40
codegen_flags: <defaults>
</compile_context>

<pallas_src>
import functools

import jax
import jax.numpy as jnp
from jax.experimental import pallas as pl
from jax.experimental.pallas import tpu as pltpu


def _ca_kernel(x_ref, w1t_ref, w2t_ref, o_ref, sum_acc, max_acc, *,
               hw_total, t_hw, acc_w, needs_mask, inv_hw):
    k = pl.program_id(1)
    last_k = pl.num_programs(1) - 1

    @pl.when(k == 0)
    def _init():
        sum_acc[...] = jnp.zeros_like(sum_acc)
        max_acc[...] = jnp.full_like(max_acc, -jnp.inf)

    x = x_ref[...].astype(jnp.float32)               # (bB, C, t_hw)

    def _accumulate(masked):
        if masked:
            col = jax.lax.broadcasted_iota(jnp.int32, x.shape, dimension=2)
            valid = (k * t_hw + col) < hw_total
            xs = jnp.where(valid, x, 0.0)
            xm = jnp.where(valid, x, -jnp.inf)
        else:
            xs, xm = x, x
        # Tree-fold the lane axis down to acc_w (=128) lanes using only
        # 128-aligned static slices + VPU add/max (no per-step XLU reduce).
        w = t_hw
        while w > acc_w:
            h = w // 2
            xs = xs[..., :h] + xs[..., h:]
            xm = jnp.maximum(xm[..., :h], xm[..., h:])
            w = h
        sum_acc[...] = sum_acc[...] + xs
        max_acc[...] = jnp.maximum(max_acc[...], xm)

    if needs_mask:
        # Only the tail HW tile pays for masking.
        @pl.when(k == last_k)
        def _masked():
            _accumulate(True)

        @pl.when(k != last_k)
        def _unmasked():
            _accumulate(False)
    else:
        _accumulate(False)

    @pl.when(k == last_k)
    def _finalize():
        # One cross-lane reduce per batch block, then the shared MLP + sigmoid
        # (fused stage 2 -- weights are resident, matmuls are tiny filler).
        avg = jnp.sum(sum_acc[...], axis=-1) * inv_hw        # (bB, C)
        mx = jnp.max(max_acc[...], axis=-1)                  # (bB, C)

        def _mlp(v):
            h = jnp.maximum(
                jnp.dot(v, w1t_ref[...], preferred_element_type=jnp.float32),
                0.0)
            return jnp.dot(h, w2t_ref[...], preferred_element_type=jnp.float32)

        o_ref[...] = jax.nn.sigmoid(_mlp(avg) + _mlp(mx)).astype(o_ref.dtype)


def _pick_batch_block(B):
    # Output block's second-to-last dim must be a multiple of 8 or the full B.
    # bB=8 keeps blocks small and gives >=2 "parallel" steps (v7x megacore)
    # whenever B >= 16.
    if B % 8 == 0:
        return 8
    return B


def _pick_hw_tile(HW, row_bytes, budget_bytes):
    # Largest 128 * 2^m tile (<= HW) that fits the budget; HW itself if tiny.
    if HW <= 128:
        return HW
    t = 128
    while (t * 2 <= HW) and (row_bytes * t * 2 <= budget_bytes):
        t *= 2
    return t


@jax.jit
def channel_attention(x, w1, w2):
    """x: (B, C, H, W); w1: (hidden, C); w2: (C, hidden) -> (B, C, 1, 1)."""
    B, C, H, W = x.shape
    HW = H * W
    hidden = w1.shape[0]
    itemsize = jnp.dtype(x.dtype).itemsize

    bB = _pick_batch_block(B)

    # Lane-dense hidden dim (exact: padded units have zero in/out weights).
    Hp = max(128, ((hidden + 127) // 128) * 128)
    w1t = jnp.zeros((C, Hp), jnp.float32).at[:, :hidden].set(
        w1.astype(jnp.float32).T)                            # (C, Hp)
    w2t = jnp.zeros((Hp, C), jnp.float32).at[:hidden, :].set(
        w2.astype(jnp.float32).T)                            # (Hp, C)

    # VMEM accounting: weights (double-buffered allocation), accumulators,
    # output block; leave the rest (capped at ~8 MiB per x block, i.e.
    # ~16 MiB double-buffered) for the streamed input.
    acc_w = min(128, HW)
    weight_bytes = 2 * 2 * C * Hp * 4
    acc_bytes = 2 * bB * C * acc_w * 4
    out_bytes = 2 * bB * C * itemsize
    fixed_bytes = weight_bytes + acc_bytes + out_bytes
    row_bytes = bB * C * itemsize
    x_budget = max(row_bytes * 128,
                   min((28 * 1024 * 1024 - fixed_bytes) // 2,
                       8 * 1024 * 1024))

    t_hw = _pick_hw_tile(HW, row_bytes, x_budget)
    num_hw_tiles = (HW + t_hw - 1) // t_hw
    needs_mask = (HW % t_hw) != 0

    x_block_bytes = row_bytes * t_hw
    vmem_limit = max(32 * 1024 * 1024,
                     2 * x_block_bytes + fixed_bytes + (1 << 20))

    x_flat = x.reshape(B, C, HW)

    out = pl.pallas_call(
        functools.partial(_ca_kernel, hw_total=HW, t_hw=t_hw, acc_w=acc_w,
                          needs_mask=needs_mask, inv_hw=1.0 / HW),
        out_shape=jax.ShapeDtypeStruct((B, C), x.dtype),
        grid_spec=pltpu.PrefetchScalarGridSpec(
            num_scalar_prefetch=0,
            grid=(B // bB, num_hw_tiles),
            in_specs=[pl.BlockSpec((bB, C, t_hw), lambda b, k: (b, 0, k)),
                      pl.BlockSpec((C, Hp), lambda b, k: (0, 0)),
                      pl.BlockSpec((Hp, C), lambda b, k: (0, 0))],
            out_specs=pl.BlockSpec((bB, C), lambda b, k: (b, 0)),
            scratch_shapes=[pltpu.VMEM((bB, C, acc_w), jnp.float32),
                            pltpu.VMEM((bB, C, acc_w), jnp.float32)]),
        compiler_params=pltpu.CompilerParams(
            dimension_semantics=("parallel", "arbitrary"),
            vmem_limit_bytes=int(vmem_limit)),
    )(x_flat, w1t, w2t)

    return out.reshape(B, C, 1, 1)


def _reference(x, w1, w2):
    # Pure-JAX reference replicating the PyTorch forward.
    avg = jnp.mean(x, axis=(2, 3))                       # (B, C)
    mx = jnp.max(x, axis=(2, 3))                         # (B, C)

    def mlp(v):
        h = jnp.maximum(v @ w1.T, 0.0)                   # (B, hidden)
        return h @ w2.T                                  # (B, C)

    out = jax.nn.sigmoid(mlp(avg) + mlp(mx))             # (B, C)
    return out[:, :, None, None]


if __name__ == "__main__":
    key = jax.random.PRNGKey(0)

    # Case 1: small shape consistent with the module (ratio=16 -> hidden = 2).
    B, C, H, W = 2, 32, 16, 16
    hidden = C // 16
    kx, k1, k2, key = jax.random.split(key, 4)
    x = jax.random.normal(kx, (B, C, H, W), dtype=jnp.float32)
    # Conv2d(C, hidden, 1, bias=False).weight -> (hidden, C)
    w1 = jax.random.normal(k1, (hidden, C), dtype=jnp.float32) * 0.1
    # Conv2d(hidden, C, 1, bias=False).weight -> (C, hidden)
    w2 = jax.random.normal(k2, (C, hidden), dtype=jnp.float32) * 0.1

    out = jax.block_until_ready(channel_attention(x, w1, w2))
    ref = _reference(x, w1, w2)
    assert out.shape == (B, C, 1, 1)
    assert jnp.allclose(out, ref, atol=1e-5, rtol=1e-5), "case1 mismatch"

    # Case 2: spatial size that exercises the tiled + tail-masked HW reduction
    # path (HW = 9216 -> one 8192-wide tile + masked tail tile).
    B2, C2, H2, W2 = 2, 32, 96, 96
    kx, k1, k2, key = jax.random.split(key, 4)
    x2 = jax.random.normal(kx, (B2, C2, H2, W2), dtype=jnp.float32)
    w1b = jax.random.normal(k1, (hidden, C2), dtype=jnp.float32) * 0.1
    w2b = jax.random.normal(k2, (C2, hidden), dtype=jnp.float32) * 0.1

    out2 = jax.block_until_ready(channel_attention(x2, w1b, w2b))
    ref2 = _reference(x2, w1b, w2b)
    assert out2.shape == (B2, C2, 1, 1)
    assert jnp.allclose(out2, ref2, atol=1e-5, rtol=1e-5), "case2 mismatch"

    print("KERNEL_OK")
</pallas_src>

<mosaic_0001>
module attributes {stable_mosaic.version = 11 : i64} {
  func.func @_ca_kernel(%arg0: i32, %arg1: i32, %arg2: memref<2x32x256xf32, #tpu.memory_space<vmem>>, %arg3: memref<32x128xf32, #tpu.memory_space<vmem>>, %arg4: memref<128x32xf32, #tpu.memory_space<vmem>>, %arg5: memref<2x32xf32, #tpu.memory_space<vmem>>, %arg6: memref<2x32x128xf32, #tpu.memory_space<vmem>>, %arg7: memref<2x32x128xf32, #tpu.memory_space<vmem>>) attributes {dimension_semantics = [#tpu.dimension_semantics<parallel>, #tpu.dimension_semantics<arbitrary>], iteration_bounds = array<i64: 1, 1>, scalar_prefetch = 0 : i64, scratch_operands = 2 : i64, tpu.core_type = #tpu.core_type<tc>, window_params = [{transform_indices = @transform_0, window_bounds = array<i64: 2, 32, 256>}, {pipeline_mode = #tpu.pipeline_mode<synchronous>, transform_indices = @transform_1, window_bounds = array<i64: 32, 128>}, {pipeline_mode = #tpu.pipeline_mode<synchronous>, transform_indices = @transform_2, window_bounds = array<i64: 128, 32>}, {transform_indices = @transform_3, window_bounds = array<i64: 2, 32>}]} {
    %c0_i32 = arith.constant 0 : i32
    %0 = arith.cmpi eq, %arg1, %c0_i32 : i32
    %1 = arith.extui %0 : i1 to i32
    %c0_i32_0 = arith.constant 0 : i32
    %2 = arith.cmpi ne, %1, %c0_i32_0 : i32
    scf.if %2 {
      %cst = arith.constant 0.000000e+00 : f32
      %19 = vector.broadcast %cst : f32 to vector<2x32x128xf32>
      %c0_17 = arith.constant 0 : index
      %c0_18 = arith.constant 0 : index
      %c0_19 = arith.constant 0 : index
      %20 = vector.load %arg6[%c0_17, %c0_18, %c0_19] : memref<2x32x128xf32, #tpu.memory_space<vmem>>, vector<2x32x128xf32>
      tpu.vector_store %arg6[%c0_17, %c0_18, %c0_19], %19 {strides = array<i32>} : memref<2x32x128xf32, #tpu.memory_space<vmem>>, vector<2x32x128xf32>,
      %cst_20 = arith.constant 0xFF800000 : f32
      %21 = vector.broadcast %cst_20 : f32 to vector<2x32x128xf32>
      %c0_21 = arith.constant 0 : index
      %c0_22 = arith.constant 0 : index
      %c0_23 = arith.constant 0 : index
      %22 = vector.load %arg7[%c0_21, %c0_22, %c0_23] : memref<2x32x128xf32, #tpu.memory_space<vmem>>, vector<2x32x128xf32>
      tpu.vector_store %arg7[%c0_21, %c0_22, %c0_23], %21 {strides = array<i32>} : memref<2x32x128xf32, #tpu.memory_space<vmem>>, vector<2x32x128xf32>,
    } else {
    }
    %c0 = arith.constant 0 : index
    %c0_1 = arith.constant 0 : index
    %c0_2 = arith.constant 0 : index
    %3 = vector.load %arg2[%c0, %c0_1, %c0_2] : memref<2x32x256xf32, #tpu.memory_space<vmem>>, vector<2x32x256xf32>
    %4 = vector.extract_strided_slice %3 {offsets = [0, 0, 0], sizes = [2, 32, 128], strides = [1, 1, 1]} : vector<2x32x256xf32> to vector<2x32x128xf32>
    %5 = vector.extract_strided_slice %3 {offsets = [0, 0, 128], sizes = [2, 32, 128], strides = [1, 1, 1]} : vector<2x32x256xf32> to vector<2x32x128xf32>
    %6 = arith.addf %4, %5 : vector<2x32x128xf32>
    %7 = vector.extract_strided_slice %3 {offsets = [0, 0, 0], sizes = [2, 32, 128], strides = [1, 1, 1]} : vector<2x32x256xf32> to vector<2x32x128xf32>
    %8 = vector.extract_strided_slice %3 {offsets = [0, 0, 128], sizes = [2, 32, 128], strides = [1, 1, 1]} : vector<2x32x256xf32> to vector<2x32x128xf32>
    %9 = arith.maximumf %7, %8 : vector<2x32x128xf32>
    %c0_3 = arith.constant 0 : index
    %c0_4 = arith.constant 0 : index
    %c0_5 = arith.constant 0 : index
    %10 = vector.load %arg6[%c0_3, %c0_4, %c0_5] : memref<2x32x128xf32, #tpu.memory_space<vmem>>, vector<2x32x128xf32>
    %11 = arith.addf %10, %6 : vector<2x32x128xf32>
    %c0_6 = arith.constant 0 : index
    %c0_7 = arith.constant 0 : index
    %c0_8 = arith.constant 0 : index
    %12 = vector.load %arg6[%c0_6, %c0_7, %c0_8] : memref<2x32x128xf32, #tpu.memory_space<vmem>>, vector<2x32x128xf32>
    tpu.vector_store %arg6[%c0_6, %c0_7, %c0_8], %11 {strides = array<i32>} : memref<2x32x128xf32, #tpu.memory_space<vmem>>, vector<2x32x128xf32>,
    %c0_9 = arith.constant 0 : index
    %c0_10 = arith.constant 0 : index
    %c0_11 = arith.constant 0 : index
    %13 = vector.load %arg7[%c0_9, %c0_10, %c0_11] : memref<2x32x128xf32, #tpu.memory_space<vmem>>, vector<2x32x128xf32>
    %14 = arith.maximumf %13, %9 : vector<2x32x128xf32>
    %c0_12 = arith.constant 0 : index
    %c0_13 = arith.constant 0 : index
    %c0_14 = arith.constant 0 : index
    %15 = vector.load %arg7[%c0_12, %c0_13, %c0_14] : memref<2x32x128xf32, #tpu.memory_space<vmem>>, vector<2x32x128xf32>
    tpu.vector_store %arg7[%c0_12, %c0_13, %c0_14], %14 {strides = array<i32>} : memref<2x32x128xf32, #tpu.memory_space<vmem>>, vector<2x32x128xf32>,
    %c0_i32_15 = arith.constant 0 : i32
    %16 = arith.cmpi eq, %arg1, %c0_i32_15 : i32
    %17 = arith.extui %16 : i1 to i32
    %c0_i32_16 = arith.constant 0 : i32
    %18 = arith.cmpi ne, %17, %c0_i32_16 : i32
    scf.if %18 {
      %c0_17 = arith.constant 0 : index
      %c0_18 = arith.constant 0 : index
      %c0_19 = arith.constant 0 : index
      %19 = vector.load %arg6[%c0_17, %c0_18, %c0_19] : memref<2x32x128xf32, #tpu.memory_space<vmem>>, vector<2x32x128xf32>
      %cst = arith.constant dense<0.000000e+00> : vector<2x32xf32>
      %20 = vector.multi_reduction <add>, %19, %cst [2] : vector<2x32x128xf32> to vector<2x32xf32>
      %cst_20 = arith.constant 3.906250e-03 : f32
      %21 = vector.broadcast %cst_20 : f32 to vector<2x32xf32>
      %22 = arith.mulf %20, %21 : vector<2x32xf32>
      %c0_21 = arith.constant 0 : index
      %c0_22 = arith.constant 0 : index
      %c0_23 = arith.constant 0 : index
      %23 = vector.load %arg7[%c0_21, %c0_22, %c0_23] : memref<2x32x128xf32, #tpu.memory_space<vmem>>, vector<2x32x128xf32>
      %cst_24 = arith.constant dense<0xFF800000> : vector<2x32xf32>
      %24 = vector.multi_reduction <maximumf>, %23, %cst_24 [2] : vector<2x32x128xf32> to vector<2x32xf32>
      %c0_25 = arith.constant 0 : index
      %c0_26 = arith.constant 0 : index
      %25 = vector.load %arg3[%c0_25, %c0_26] : memref<32x128xf32, #tpu.memory_space<vmem>>, vector<32x128xf32>
      %cst_27 = arith.constant dense<0.000000e+00> : vector<2x128xf32>
      %26 = tpu.matmul %22, %25, %cst_27 {dimension_numbers = #tpu.dot_dimension_numbers<[1], [0], [0], [1], [0, 0, 1, 1], [], []>} : vector<2x32xf32>, vector<32x128xf32>, vector<2x128xf32> -> vector<2x128xf32>
      %cst_28 = arith.constant 0.000000e+00 : f32
      %27 = vector.broadcast %cst_28 : f32 to vector<2x128xf32>
      %28 = arith.maximumf %26, %27 : vector<2x128xf32>
      %c0_29 = arith.constant 0 : index
      %c0_30 = arith.constant 0 : index
      %29 = vector.load %arg4[%c0_29, %c0_30] : memref<128x32xf32, #tpu.memory_space<vmem>>, vector<128x32xf32>
      %cst_31 = arith.constant dense<0.000000e+00> : vector<2x32xf32>
      %30 = tpu.matmul %28, %29, %cst_31 {dimension_numbers = #tpu.dot_dimension_numbers<[1], [0], [0], [1], [0, 0, 1, 1], [], []>} : vector<2x128xf32>, vector<128x32xf32>, vector<2x32xf32> -> vector<2x32xf32>
      %c0_32 = arith.constant 0 : index
      %c0_33 = arith.constant 0 : index
      %31 = vector.load %arg3[%c0_32, %c0_33] : memref<32x128xf32, #tpu.memory_space<vmem>>, vector<32x128xf32>
      %cst_34 = arith.constant dense<0.000000e+00> : vector<2x128xf32>
      %32 = tpu.matmul %24, %31, %cst_34 {dimension_numbers = #tpu.dot_dimension_numbers<[1], [0], [0], [1], [0, 0, 1, 1], [], []>} : vector<2x32xf32>, vector<32x128xf32>, vector<2x128xf32> -> vector<2x128xf32>
      %cst_35 = arith.constant 0.000000e+00 : f32
      %33 = vector.broadcast %cst_35 : f32 to vector<2x128xf32>
      %34 = arith.maximumf %32, %33 : vector<2x128xf32>
      %c0_36 = arith.constant 0 : index
      %c0_37 = arith.constant 0 : index
      %35 = vector.load %arg4[%c0_36, %c0_37] : memref<128x32xf32, #tpu.memory_space<vmem>>, vector<128x32xf32>
      %cst_38 = arith.constant dense<0.000000e+00> : vector<2x32xf32>
      %36 = tpu.matmul %34, %35, %cst_38 {dimension_numbers = #tpu.dot_dimension_numbers<[1], [0], [0], [1], [0, 0, 1, 1], [], []>} : vector<2x128xf32>, vector<128x32xf32>, vector<2x32xf32> -> vector<2x32xf32>
      %37 = arith.addf %30, %36 : vector<2x32xf32>
      %38 = arith.negf %37 : vector<2x32xf32>
      %39 = math.exp %38 : vector<2x32xf32>
      %cst_39 = arith.constant 1.000000e+00 : f32
      %40 = vector.broadcast %cst_39 : f32 to vector<2x32xf32>
      %41 = arith.addf %40, %39 : vector<2x32xf32>
      %42 = arith.divf %40, %41 : vector<2x32xf32>
      %c0_40 = arith.constant 0 : index
      %c0_41 = arith.constant 0 : index
      %43 = vector.load %arg5[%c0_40, %c0_41] : memref<2x32xf32, #tpu.memory_space<vmem>>, vector<2x32xf32>
      tpu.vector_store %arg5[%c0_40, %c0_41], %42 {strides = array<i32>} : memref<2x32xf32, #tpu.memory_space<vmem>>, vector<2x32xf32>,
    } else {
    }
    return
  }
  func.func @transform_0(%arg0: i32, %arg1: i32) -> (i32, i32, i32) {
    %c0_i32 = arith.constant 0 : i32
    %c0_i32_0 = arith.constant 0 : i32
    return %arg0, %c0_i32, %arg1 : i32, i32, i32
  }
  func.func @transform_1(%arg0: i32, %arg1: i32) -> (i32, i32) {
    %c0_i32 = arith.constant 0 : i32
    %c0_i32_0 = arith.constant 0 : i32
    %c0_i32_1 = arith.constant 0 : i32
    return %c0_i32, %c0_i32_0 : i32, i32
  }
  func.func @transform_2(%arg0: i32, %arg1: i32) -> (i32, i32) {
    %c0_i32 = arith.constant 0 : i32
    %c0_i32_0 = arith.constant 0 : i32
    %c0_i32_1 = arith.constant 0 : i32
    return %c0_i32, %c0_i32_0 : i32, i32
  }
  func.func @transform_3(%arg0: i32, %arg1: i32) -> (i32, i32) {
    %c0_i32 = arith.constant 0 : i32
    %c0_i32_0 = arith.constant 0 : i32
    return %arg0, %c0_i32 : i32, i32
  }
}

</mosaic_0001>

<llo_original>
// kernel: channel_attention.1
$region0: #{channel_attention.1}
  #allocation0 [shape = 'u32[]', space=smem, size = 0x4, offset = 0x4, fixed_abs, tag = 'smem constant byte address 0x4 - core index']
  #allocation1 [shape = 'u32[144,128]{1,0:T(1,128)}', space=vmem, size = 0x12000, scoped, tag = 'internal scratch']
  #allocation2 [shape = 'f32[2,32,128]{2,1,0:T(8,128)}', space=vmem, size = 0x8000, scoped, tag = 'scratch operand']
  #allocation3 [shape = 'f32[2,32,128]{2,1,0:T(8,128)}', space=vmem, size = 0x8000, scoped, tag = 'scratch operand']
  %s0 = inlined_call_operand.vmem [shape: f32[2,32,256], index: 0, kind: input, shape index: {}]
  %s1 = inlined_call_operand.vmem [shape: f32[32,128], index: 1, kind: input, shape index: {}]
  %s2 = inlined_call_operand.vmem [shape: f32[128,32], index: 2, kind: input, shape index: {}]
  %s3 = inlined_call_operand.hbm [shape: f32[2,32], index: 3, kind: output, shape index: {}]
  %s4 = sld [smem:[#allocation0]]
  $region30: #{channel_attention.1} parent=0
    _
  %s6 = ssub.s32 1, %s4
  %s7 = scalar_select 0, %s6, %s4
  $region1: #{channel_attention.1} parent=0
    #allocation4 [shape = 'u8[1024]{0}', space=vmem, size = 0x400, scoped, tag = 'output window, operand 0, single buffered']
    #allocation5 [shape = 's32[1]{0}', space=sflag, size = 0x4, scoped, tag = 'scoped memory for channel_attention.1']
    %8 = vsyncpa [#allocation5], 0
    // Predicated region
    $region2: #{channel_attention.1} parent=1 // pred_check
      _
    $region3: #{channel_attention.1} parent=1 // pred_check_branch
      %10 = sbr.rel (0) target = $region5
    $region4: #{channel_attention.1} parent=1 // pred_region
      _
    $region5: #{channel_attention.1} parent=1 // pred_fallthru
      _
    // Predicated region
    $region6: #{channel_attention.1} parent=1 // pred_check
      _
    $region7: #{channel_attention.1} parent=1 // pred_check_branch
      %12 = sbr.rel (0) target = $region9
    $region8: #{channel_attention.1} parent=1 // pred_region
      _
    $region9: #{channel_attention.1} parent=1 // pred_fallthru
      _
    // Predicated region
    $region10: #{channel_attention.1} parent=1 // pred_check
      _
    $region11: #{channel_attention.1} parent=1 // pred_check_branch
      %14 = sbr.rel (0) target = $region13
    $region12: #{channel_attention.1} parent=1 // pred_region
      _
    $region13: #{channel_attention.1} parent=1 // pred_fallthru
      _
    %p15 = scmp.eq.s32.totalorder 0, 0
    // Predicated region
    $region14: #{channel_attention.1} parent=1 // pred_check
      %p16 = pneg %p15
    $region15: #{channel_attention.1} parent=1 // pred_check_branch
      %18 = sbr.rel (%p16) target = $region17
    $region16: #{channel_attention.1} parent=1 // pred_region
      %19 = vst [vmem:[#allocation2] sm:$0xff] 0.0
      %20 = vst [vmem:[#allocation2 + $0x8] sm:$0xff] 0.0
      %21 = vst [vmem:[#allocation2 + $0x10] sm:$0xff] 0.0
      %22 = vst [vmem:[#allocation2 + $0x18] sm:$0xff] 0.0
      %23 = vst [vmem:[#allocation2 + $0x20] sm:$0xff] 0.0
      %24 = vst [vmem:[#allocation2 + $0x28] sm:$0xff] 0.0
      %25 = vst [vmem:[#allocation2 + $0x30] sm:$0xff] 0.0
      %26 = vst [vmem:[#allocation2 + $0x38] sm:$0xff] 0.0
      %27 = vst [vmem:[#allocation3] sm:$0xff] -inf
      %28 = vst [vmem:[#allocation3 + $0x8] sm:$0xff] -inf
      %29 = vst [vmem:[#allocation3 + $0x10] sm:$0xff] -inf
      %30 = vst [vmem:[#allocation3 + $0x18] sm:$0xff] -inf
      %31 = vst [vmem:[#allocation3 + $0x20] sm:$0xff] -inf
      %32 = vst [vmem:[#allocation3 + $0x28] sm:$0xff] -inf
      %33 = vst [vmem:[#allocation3 + $0x30] sm:$0xff] -inf
      %34 = vst [vmem:[#allocation3 + $0x38] sm:$0xff] -inf
    $region17: #{channel_attention.1} parent=1 // pred_fallthru
      _
    %v35 = vld [vmem:[%s0] sm:$0xff]
    %v36 = vld [vmem:[%s0 + $0x8] sm:$0xff]
    %v37 = vld [vmem:[%s0 + $0x10] sm:$0xff]
    %v38 = vld [vmem:[%s0 + $0x18] sm:$0xff]
    %v39 = vld [vmem:[%s0 + $0x20] sm:$0xff]
    %v40 = vld [vmem:[%s0 + $0x28] sm:$0xff]
    %v41 = vld [vmem:[%s0 + $0x30] sm:$0xff]
    %v42 = vld [vmem:[%s0 + $0x38] sm:$0xff]
    %v43 = vld [vmem:[%s0 + $0x40] sm:$0xff]
    %v44 = vld [vmem:[%s0 + $0x48] sm:$0xff]
    %v45 = vld [vmem:[%s0 + $0x50] sm:$0xff]
    %v46 = vld [vmem:[%s0 + $0x58] sm:$0xff]
    %v47 = vld [vmem:[%s0 + $0x60] sm:$0xff]
    %v48 = vld [vmem:[%s0 + $0x68] sm:$0xff]
    %v49 = vld [vmem:[%s0 + $0x70] sm:$0xff]
    %v50 = vld [vmem:[%s0 + $0x78] sm:$0xff]
    %v51 = vadd.f32 %v35, %v36
    %v52 = vadd.f32 %v37, %v38
    %v53 = vadd.f32 %v39, %v40
    %v54 = vadd.f32 %v41, %v42
    %v55 = vadd.f32 %v43, %v44
    %v56 = vadd.f32 %v45, %v46
    %v57 = vadd.f32 %v47, %v48
    %v58 = vadd.f32 %v49, %v50
    %v59 = vmax.f32 %v35, %v36
    %v60 = vmax.f32 %v37, %v38
    %v61 = vmax.f32 %v39, %v40
    %v62 = vmax.f32 %v41, %v42
    %v63 = vmax.f32 %v43, %v44
    %v64 = vmax.f32 %v45, %v46
    %v65 = vmax.f32 %v47, %v48
    %v66 = vmax.f32 %v49, %v50
    %v67 = vld [vmem:[#allocation2] sm:$0xff]
    %v68 = vld [vmem:[#allocation2 + $0x8] sm:$0xff]
    %v69 = vld [vmem:[#allocation2 + $0x10] sm:$0xff]
    %v70 = vld [vmem:[#allocation2 + $0x18] sm:$0xff]
    %v71 = vld [vmem:[#allocation2 + $0x20] sm:$0xff]
    %v72 = vld [vmem:[#allocation2 + $0x28] sm:$0xff]
    %v73 = vld [vmem:[#allocation2 + $0x30] sm:$0xff]
    %v74 = vld [vmem:[#allocation2 + $0x38] sm:$0xff]
    %v75 = vadd.f32 %v67, %v51
    %v76 = vadd.f32 %v68, %v52
    %v77 = vadd.f32 %v69, %v53
    %v78 = vadd.f32 %v70, %v54
    %v79 = vadd.f32 %v71, %v55
    %v80 = vadd.f32 %v72, %v56
    %v81 = vadd.f32 %v73, %v57
    %v82 = vadd.f32 %v74, %v58
    %83 = vst [vmem:[#allocation2] sm:$0xff] %v75
    %84 = vst [vmem:[#allocation2 + $0x8] sm:$0xff] %v76
    %85 = vst [vmem:[#allocation2 + $0x10] sm:$0xff] %v77
    %86 = vst [vmem:[#allocation2 + $0x18] sm:$0xff] %v78
    %87 = vst [vmem:[#allocation2 + $0x20] sm:$0xff] %v79
    %88 = vst [vmem:[#allocation2 + $0x28] sm:$0xff] %v80
    %89 = vst [vmem:[#allocation2 + $0x30] sm:$0xff] %v81
    %90 = vst [vmem:[#allocation2 + $0x38] sm:$0xff] %v82
    %v91 = vld [vmem:[#allocation3] sm:$0xff]
    %v92 = vld [vmem:[#allocation3 + $0x8] sm:$0xff]
    %v93 = vld [vmem:[#allocation3 + $0x10] sm:$0xff]
    %v94 = vld [vmem:[#allocation3 + $0x18] sm:$0xff]
    %v95 = vld [vmem:[#allocation3 + $0x20] sm:$0xff]
    %v96 = vld [vmem:[#allocation3 + $0x28] sm:$0xff]
    %v97 = vld [vmem:[#allocation3 + $0x30] sm:$0xff]
    %v98 = vld [vmem:[#allocation3 + $0x38] sm:$0xff]
    %v99 = vmax.f32 %v91, %v59
    %v100 = vmax.f32 %v92, %v60
    %v101 = vmax.f32 %v93, %v61
    %v102 = vmax.f32 %v94, %v62
    %v103 = vmax.f32 %v95, %v63
    %v104 = vmax.f32 %v96, %v64
    %v105 = vmax.f32 %v97, %v65
    %v106 = vmax.f32 %v98, %v66
    %107 = vst [vmem:[#allocation3] sm:$0xff] %v99
    %108 = vst [vmem:[#allocation3 + $0x8] sm:$0xff] %v100
    %109 = vst [vmem:[#allocation3 + $0x10] sm:$0xff] %v101
    %110 = vst [vmem:[#allocation3 + $0x18] sm:$0xff] %v102
    %111 = vst [vmem:[#allocation3 + $0x20] sm:$0xff] %v103
    %112 = vst [vmem:[#allocation3 + $0x28] sm:$0xff] %v104
    %113 = vst [vmem:[#allocation3 + $0x30] sm:$0xff] %v105
    %114 = vst [vmem:[#allocation3 + $0x38] sm:$0xff] %v106
    // Predicated region
    $region18: #{channel_attention.1} parent=1 // pred_check
      %p115 = pneg %p15
    $region19: #{channel_attention.1} parent=1 // pred_check_branch
      %117 = sbr.rel (%p115) target = $region21
    $region20: #{channel_attention.1} parent=1 // pred_region
      %v118 = vld [vmem:[#allocation2] sm:$0xff]
      %v119 = vld [vmem:[#allocation2 + $0x8] sm:$0xff]
      %v120 = vld [vmem:[#allocation2 + $0x10] sm:$0xff]
      %v121 = vld [vmem:[#allocation2 + $0x18] sm:$0xff]
      %v122 = vld [vmem:[#allocation2 + $0x20] sm:$0xff]
      %v123 = vld [vmem:[#allocation2 + $0x28] sm:$0xff]
      %v124 = vld [vmem:[#allocation2 + $0x30] sm:$0xff]
      %v125 = vld [vmem:[#allocation2 + $0x38] sm:$0xff]
      %126 = vadd.xlane.f32.xlu0 %v118
      %v127 = vpop.xlane.xlu0 %126
      %128 = vadd.xlane.f32.xlu0 %v119
      %v129 = vpop.xlane.xlu0 %128
      %130 = vadd.xlane.f32.xlu0 %v120
      %v131 = vpop.xlane.xlu0 %130
      %132 = vadd.xlane.f32.xlu0 %v121
      %v133 = vpop.xlane.xlu0 %132
      %134 = vadd.xlane.f32.xlu0 %v122
      %v135 = vpop.xlane.xlu0 %134
      %136 = vadd.xlane.f32.xlu0 %v123
      %v137 = vpop.xlane.xlu0 %136
      %138 = vadd.xlane.f32.xlu0 %v124
      %v139 = vpop.xlane.xlu0 %138
      %140 = vadd.xlane.f32.xlu0 %v125
      %v141 = vpop.xlane.xlu0 %140
      %v142 = vmul.f32 %v127, 0.00390625
      %v143 = vmul.f32 %v129, 0.00390625
      %v144 = vmul.f32 %v131, 0.00390625
      %v145 = vmul.f32 %v133, 0.00390625
      %v146 = vmul.f32 %v135, 0.00390625
      %v147 = vmul.f32 %v137, 0.00390625
      %v148 = vmul.f32 %v139, 0.00390625
      %v149 = vmul.f32 %v141, 0.00390625
      %v150 = vld [vmem:[#allocation3] sm:$0xff]
      %v151 = vld [vmem:[#allocation3 + $0x8] sm:$0xff]
      %v152 = vld [vmem:[#allocation3 + $0x10] sm:$0xff]
      %v153 = vld [vmem:[#allocation3 + $0x18] sm:$0xff]
      %v154 = vld [vmem:[#allocation3 + $0x20] sm:$0xff]
      %v155 = vld [vmem:[#allocation3 + $0x28] sm:$0xff]
      %v156 = vld [vmem:[#allocation3 + $0x30] sm:$0xff]
      %v157 = vld [vmem:[#allocation3 + $0x38] sm:$0xff]
      %158 = vmax.xlane.f32.xlu0 %v150
      %v159 = vpop.xlane.xlu0 %158
      %160 = vmax.xlane.f32.xlu0 %v151
      %v161 = vpop.xlane.xlu0 %160
      %162 = vmax.xlane.f32.xlu0 %v152
      %v163 = vpop.xlane.xlu0 %162
      %164 = vmax.xlane.f32.xlu0 %v153
      %v165 = vpop.xlane.xlu0 %164
      %166 = vmax.xlane.f32.xlu0 %v154
      %v167 = vpop.xlane.xlu0 %166
      %168 = vmax.xlane.f32.xlu0 %v155
      %v169 = vpop.xlane.xlu0 %168
      %170 = vmax.xlane.f32.xlu0 %v156
      %v171 = vpop.xlane.xlu0 %170
      %172 = vmax.xlane.f32.xlu0 %v157
      %v173 = vpop.xlane.xlu0 %172
      %v174 = vld [vmem:[%s1] sm:$0xff]
      %v175 = vld [vmem:[%s1 + $0x8] sm:$0xff]
      %v176 = vld [vmem:[%s1 + $0x10] sm:$0xff]
      %v177 = vld [vmem:[%s1 + $0x18] sm:$0xff]
      %v186 = vlaneseq
      %v187 = vand.u32 %v186, 127
      %v188 = vlaneseq
      %v189 = vshrl.u32 %v188, 7
      %v190 = vsub.s32 %v187, %v189
      %v191 = vrot.slane %v142, %v190
      %v192 = vadd.s32 %v187, 4294967288
      %v193 = vlaneseq
      %v194 = vshrl.u32 %v193, 7
      %v195 = vsub.s32 %v192, %v194
      %v196 = vrot.slane %v143, %v195
      %vm197 = vcmask 130112
      %v198 = vsel %vm197, %v196, %v191
      %v199 = vadd.s32 %v187, 4294967280
      %v200 = vlaneseq
      %v201 = vshrl.u32 %v200, 7
      %v202 = vsub.s32 %v199, %v201
      %v203 = vrot.slane %v144, %v202
      %vm204 = vcmask 195712
      %v205 = vsel %vm204, %v203, %v198
      %v206 = vadd.s32 %v187, 4294967272
      %v207 = vlaneseq
      %v208 = vshrl.u32 %v207, 7
      %v209 = vsub.s32 %v206, %v208
      %v210 = vrot.slane %v145, %v209
      %vm211 = vcmask 261312
      %v212 = vsel %vm211, %v210, %v205
      %v213 = vlaneseq
      %v214 = vshrl.u32 %v213, 7
      %v215 = vsub.s32 %v187, %v214
      %v216 = vrot.slane %v146, %v215
      %v217 = vlaneseq
      %v218 = vshrl.u32 %v217, 7
      %v219 = vsub.s32 %v192, %v218
      %v220 = vrot.slane %v147, %v219
      %v221 = vsel %vm197, %v220, %v216
      %v222 = vlaneseq
      %v223 = vshrl.u32 %v222, 7
      %v224 = vsub.s32 %v199, %v223
      %v225 = vrot.slane %v148, %v224
      %v226 = vsel %vm204, %v225, %v221
      %v227 = vlaneseq
      %v228 = vshrl.u32 %v227, 7
      %v229 = vsub.s32 %v206, %v228
      %v230 = vrot.slane %v149, %v229
      %v231 = vsel %vm211, %v230, %v226
      %vm232 = vcmask 1041409
      %v233 = vsel %vm232, %v231, %v212
      %vm234 = vcmask 261120
      %v235 = vsel %vm234, %v233, 0
      %237 = vmatprep.subr.mxu0 0.0
      %238 = vmatpush1.msra.mxu0 %v174
      %239 = vmatprep.subr.mxu0 0.0
      %240 = vmatpush1.msra.mxu0 %v175
      %241 = vmatprep.subr.mxu0 0.0
      %242 = vmatpush1.msra.mxu0 %v176
      %243 = vmatprep.subr.mxu0 0.0
      %244 = vmatpush1.msra.mxu0 %v177
      %245 = vmatprep.subr.mxu0 0.0
      %246 = vmatpush1.msra.mxu0 0.0
      %247 = vmatprep.subr.mxu0 0.0
      %248 = vmatpush1.msra.mxu0 0.0
      %249 = vmatprep.subr.mxu0 0.0
      %250 = vmatpush1.msra.mxu0 0.0
      %251 = vmatprep.subr.mxu0 0.0
      %252 = vmatpush1.msra.mxu0 0.0
      %253 = vmatprep.subr.mxu0 0.0
      %254 = vmatpush1.msra.mxu0 0.0
      %255 = vmatprep.subr.mxu0 0.0
      %256 = vmatpush1.msra.mxu0 0.0
      %257 = vmatprep.subr.mxu0 0.0
      %258 = vmatpush1.msra.mxu0 0.0
      %259 = vmatprep.subr.mxu0 0.0
      %260 = vmatpush1.msra.mxu0 0.0
      %261 = vmatprep.subr.mxu0 0.0
      %262 = vmatpush1.msra.mxu0 0.0
      %263 = vmatprep.subr.mxu0 0.0
      %264 = vmatpush1.msra.mxu0 0.0
      %265 = vmatprep.subr.mxu0 0.0
      %266 = vmatpush1.msra.mxu0 0.0
      %267 = vmatprep.subr.mxu0 0.0
      %268 = vmatpush1.msra.mxu0 0.0
      %269 = vmatprep.subr.mxu0 0.0
      %270 = vmatpush1.msra.mxu0 0.0
      %271 = vmatprep.subr.mxu0 0.0
      %272 = vmatpush1.msra.mxu0 0.0
      %273 = vmatprep.subr.mxu0 0.0
      %274 = vmatpush1.msra.mxu0 0.0
      %275 = vmatprep.subr.mxu0 0.0
      %276 = vmatpush1.msra.mxu0 0.0
      %277 = vmatprep.subr.mxu0 0.0
      %278 = vmatpush1.msra.mxu0 0.0
      %279 = vmatprep.subr.mxu0 0.0
      %280 = vmatpush1.msra.mxu0 0.0
      %281 = vmatprep.subr.mxu0 0.0
      %282 = vmatpush1.msra.mxu0 0.0
      %283 = vmatprep.subr.mxu0 0.0
      %284 = vmatpush1.msra.mxu0 0.0
      %285 = vmatprep.subr.mxu0 0.0
      %286 = vmatpush1.msra.mxu0 0.0
      %287 = vmatprep.subr.mxu0 0.0
      %288 = vmatpush1.msra.mxu0 0.0
      %289 = vmatprep.subr.mxu0 0.0
      %290 = vmatpush1.msra.mxu0 0.0
      %291 = vmatprep.subr.mxu0 0.0
      %292 = vmatpush1.msra.mxu0 0.0
      %293 = vmatprep.subr.mxu0 0.0
      %294 = vmatpush1.msra.mxu0 0.0
      %295 = vmatprep.subr.mxu0 0.0
      %296 = vmatpush1.msra.mxu0 0.0
      %297 = vmatprep.subr.mxu0 0.0
      %298 = vmatpush1.msra.mxu0 0.0
      %299 = vmatprep.subr.mxu0 0.0
      %300 = vmatpush1.msra.mxu0 0.0
      %301 = vmatprep.mubr.f32.mxu0 0.0
      %302 = vmatmul.mubr.f32.gmra.mrb[0].mxu0 %v235
      %v303 = vpop.f32.mrb[0].mxu0
      %v304 = vadd.f32 0.0, %v303
      %v305 = vpop.f32.mrb[0].mxu0
      %306 = vdwg.mxu0
      %v307 = vmax.f32 %v304, 0.0
      %v308 = vld [vmem:[%s2] sm:$0xff]
      %v309 = vld [vmem:[%s2 + $0x8] sm:$0xff]
      %v310 = vld [vmem:[%s2 + $0x10] sm:$0xff]
      %v311 = vld [vmem:[%s2 + $0x18] sm:$0xff]
      %v312 = vld [vmem:[%s2 + $0x20] sm:$0xff]
      %v313 = vld [vmem:[%s2 + $0x28] sm:$0xff]
      %v314 = vld [vmem:[%s2 + $0x30] sm:$0xff]
      %v315 = vld [vmem:[%s2 + $0x38] sm:$0xff]
      %v316 = vld [vmem:[%s2 + $0x40] sm:$0xff]
      %v317 = vld [vmem:[%s2 + $0x48] sm:$0xff]
      %v318 = vld [vmem:[%s2 + $0x50] sm:$0xff]
      %v319 = vld [vmem:[%s2 + $0x58] sm:$0xff]
      %v320 = vld [vmem:[%s2 + $0x60] sm:$0xff]
      %v321 = vld [vmem:[%s2 + $0x68] sm:$0xff]
      %v322 = vld [vmem:[%s2 + $0x70] sm:$0xff]
      %v323 = vld [vmem:[%s2 + $0x78] sm:$0xff]
      %v332 = vlaneseq
      %v333 = vshrl.u32 %v332, 7
      %v334 = vsub.s32 %v187, %v333
      %v335 = vrot.slane %v159, %v334
      %v336 = vlaneseq
      %v337 = vshrl.u32 %v336, 7
      %v338 = vsub.s32 %v192, %v337
      %v339 = vrot.slane %v161, %v338
      %v340 = vsel %vm197, %v339, %v335
      %v341 = vlaneseq
      %v342 = vshrl.u32 %v341, 7
      %v343 = vsub.s32 %v199, %v342
      %v344 = vrot.slane %v163, %v343
      %v345 = vsel %vm204, %v344, %v340
      %v346 = vlaneseq
      %v347 = vshrl.u32 %v346, 7
      %v348 = vsub.s32 %v206, %v347
      %v349 = vrot.slane %v165, %v348
      %v350 = vsel %vm211, %v349, %v345
      %v351 = vlaneseq
      %v352 = vshrl.u32 %v351, 7
      %v353 = vsub.s32 %v187, %v352
      %v354 = vrot.slane %v167, %v353
      %v355 = vlaneseq
      %v356 = vshrl.u32 %v355, 7
      %v357 = vsub.s32 %v192, %v356
      %v358 = vrot.slane %v169, %v357
      %v359 = vsel %vm197, %v358, %v354
      %v360 = vlaneseq
      %v361 = vshrl.u32 %v360, 7
      %v362 = vsub.s32 %v199, %v361
      %v363 = vrot.slane %v171, %v362
      %v364 = vsel %vm204, %v363, %v359
      %v365 = vlaneseq
      %v366 = vshrl.u32 %v365, 7
      %v367 = vsub.s32 %v206, %v366
      %v368 = vrot.slane %v173, %v367
      %v369 = vsel %vm211, %v368, %v364
      %v370 = vsel %vm232, %v369, %v350
      %v371 = vsel %vm234, %v370, 0
      %373 = vmatprep.subr.mxu0 0.0
      %374 = vmatpush1.msra.mxu0 %v174
      %375 = vmatprep.subr.mxu0 0.0
      %376 = vmatpush1.msra.mxu0 %v175
      %377 = vmatprep.subr.mxu0 0.0
      %378 = vmatpush1.msra.mxu0 %v176
      %379 = vmatprep.subr.mxu0 0.0
      %380 = vmatpush1.msra.mxu0 %v177
      %381 = vmatprep.subr.mxu0 0.0
      %382 = vmatpush1.msra.mxu0 0.0
      %383 = vmatprep.subr.mxu0 0.0
      %384 = vmatpush1.msra.mxu0 0.0
      %385 = vmatprep.subr.mxu0 0.0
      %386 = vmatpush1.msra.mxu0 0.0
      %387 = vmatprep.subr.mxu0 0.0
      %388 = vmatpush1.msra.mxu0 0.0
      %389 = vmatprep.subr.mxu0 0.0
      %390 = vmatpush1.msra.mxu0 0.0
      %391 = vmatprep.subr.mxu0 0.0
      %392 = vmatpush1.msra.mxu0 0.0
      %393 = vmatprep.subr.mxu0 0.0
      %394 = vmatpush1.msra.mxu0 0.0
      %395 = vmatprep.subr.mxu0 0.0
      %396 = vmatpush1.msra.mxu0 0.0
      %397 = vmatprep.subr.mxu0 0.0
      %398 = vmatpush1.msra.mxu0 0.0
      %399 = vmatprep.subr.mxu0 0.0
      %400 = vmatpush1.msra.mxu0 0.0
      %401 = vmatprep.subr.mxu0 0.0
      %402 = vmatpush1.msra.mxu0 0.0
      %403 = vmatprep.subr.mxu0 0.0
      %404 = vmatpush1.msra.mxu0 0.0
      %405 = vmatprep.subr.mxu0 0.0
      %406 = vmatpush1.msra.mxu0 0.0
      %407 = vmatprep.subr.mxu0 0.0
      %408 = vmatpush1.msra.mxu0 0.0
      %409 = vmatprep.subr.mxu0 0.0
      %410 = vmatpush1.msra.mxu0 0.0
      %411 = vmatprep.subr.mxu0 0.0
      %412 = vmatpush1.msra.mxu0 0.0
      %413 = vmatprep.subr.mxu0 0.0
      %414 = vmatpush1.msra.mxu0 0.0
      %415 = vmatprep.subr.mxu0 0.0
      %416 = vmatpush1.msra.mxu0 0.0
      %417 = vmatprep.subr.mxu0 0.0
      %418 = vmatpush1.msra.mxu0 0.0
      %419 = vmatprep.subr.mxu0 0.0
      %420 = vmatpush1.msra.mxu0 0.0
      %421 = vmatprep.subr.mxu0 0.0
      %422 = vmatpush1.msra.mxu0 0.0
      %423 = vmatprep.subr.mxu0 0.0
      %424 = vmatpush1.msra.mxu0 0.0
      %425 = vmatprep.subr.mxu0 0.0
      %426 = vmatpush1.msra.mxu0 0.0
      %427 = vmatprep.subr.mxu0 0.0
      %428 = vmatpush1.msra.mxu0 0.0
      %429 = vmatprep.subr.mxu0 0.0
      %430 = vmatpush1.msra.mxu0 0.0
      %431 = vmatprep.subr.mxu0 0.0
      %432 = vmatpush1.msra.mxu0 0.0
      %433 = vmatprep.subr.mxu0 0.0
      %434 = vmatpush1.msra.mxu0 0.0
      %435 = vmatprep.subr.mxu0 0.0
      %436 = vmatpush1.msra.mxu0 0.0
      %437 = vmatprep.mubr.f32.mxu0 0.0
      %438 = vmatmul.mubr.f32.gmra.mrb[0].mxu0 %v371
      %v439 = vpop.f32.mrb[0].mxu0
      %v440 = vadd.f32 0.0, %v439
      %v441 = vpop.f32.mrb[0].mxu0
      %442 = vdwg.mxu0
      %v443 = vmax.f32 %v440, 0.0
      %444 = vmatprep.subr.mxu0 0.0
      %445 = vmatpush1.msra.mxu0 %v308
      %446 = vmatprep.subr.mxu0 0.0
      %447 = vmatpush1.msra.mxu0 %v309
      %448 = vmatprep.subr.mxu0 0.0
      %449 = vmatpush1.msra.mxu0 %v310
      %450 = vmatprep.subr.mxu0 0.0
      %451 = vmatpush1.msra.mxu0 %v311
      %452 = vmatprep.subr.mxu0 0.0
      %453 = vmatpush1.msra.mxu0 %v312
      %454 = vmatprep.subr.mxu0 0.0
      %455 = vmatpush1.msra.mxu0 %v313
      %456 = vmatprep.subr.mxu0 0.0
      %457 = vmatpush1.msra.mxu0 %v314
      %458 = vmatprep.subr.mxu0 0.0
      %459 = vmatpush1.msra.mxu0 %v315
      %460 = vmatprep.subr.mxu0 0.0
      %461 = vmatpush1.msra.mxu0 %v316
      %462 = vmatprep.subr.mxu0 0.0
      %463 = vmatpush1.msra.mxu0 %v317
      %464 = vmatprep.subr.mxu0 0.0
      %465 = vmatpush1.msra.mxu0 %v318
      %466 = vmatprep.subr.mxu0 0.0
      %467 = vmatpush1.msra.mxu0 %v319
      %468 = vmatprep.subr.mxu0 0.0
      %469 = vmatpush1.msra.mxu0 %v320
      %470 = vmatprep.subr.mxu0 0.0
      %471 = vmatpush1.msra.mxu0 %v321
      %472 = vmatprep.subr.mxu0 0.0
      %473 = vmatpush1.msra.mxu0 %v322
      %474 = vmatprep.subr.mxu0 0.0
      %475 = vmatpush1.msra.mxu0 %v323
      %476 = vmatprep.subr.mxu0 0.0
      %477 = vmatpush1.msra.mxu0 0.0
      %478 = vmatprep.subr.mxu0 0.0
      %479 = vmatpush1.msra.mxu0 0.0
      %480 = vmatprep.subr.mxu0 0.0
      %481 = vmatpush1.msra.mxu0 0.0
      %482 = vmatprep.subr.mxu0 0.0
      %483 = vmatpush1.msra.mxu0 0.0
      %484 = vmatprep.subr.mxu0 0.0
      %485 = vmatpush1.msra.mxu0 0.0
      %486 = vmatprep.subr.mxu0 0.0
      %487 = vmatpush1.msra.mxu0 0.0
      %488 = vmatprep.subr.mxu0 0.0
      %489 = vmatpush1.msra.mxu0 0.0
      %490 = vmatprep.subr.mxu0 0.0
      %491 = vmatpush1.msra.mxu0 0.0
      %492 = vmatprep.subr.mxu0 0.0
      %493 = vmatpush1.msra.mxu0 0.0
      %494 = vmatprep.subr.mxu0 0.0
      %495 = vmatpush1.msra.mxu0 0.0
      %496 = vmatprep.subr.mxu0 0.0
      %497 = vmatpush1.msra.mxu0 0.0
      %498 = vmatprep.subr.mxu0 0.0
      %499 = vmatpush1.msra.mxu0 0.0
      %500 = vmatprep.subr.mxu0 0.0
      %501 = vmatpush1.msra.mxu0 0.0
      %502 = vmatprep.subr.mxu0 0.0
      %503 = vmatpush1.msra.mxu0 0.0
      %504 = vmatprep.subr.mxu0 0.0
      %505 = vmatpush1.msra.mxu0 0.0
      %506 = vmatprep.subr.mxu0 0.0
      %507 = vmatpush1.msra.mxu0 0.0
      %508 = vmatprep.mubr.f32.mxu0 0.0
      %509 = vmatmul.mubr.f32.gmra.mrb[0].mxu0 %v443
      %v510 = vpop.f32.mrb[0].mxu0
      %v511 = vadd.f32 0.0, %v510
      %v512 = vpop.f32.mrb[0].mxu0
      %513 = vdwg.mxu0
      %514 = vmatprep.subr.mxu0 0.0
      %515 = vmatpush1.msra.mxu0 %v308
      %516 = vmatprep.subr.mxu0 0.0
      %517 = vmatpush1.msra.mxu0 %v309
      %518 = vmatprep.subr.mxu0 0.0
      %519 = vmatpush1.msra.mxu0 %v310
      %520 = vmatprep.subr.mxu0 0.0
      %521 = vmatpush1.msra.mxu0 %v311
      %522 = vmatprep.subr.mxu0 0.0
      %523 = vmatpush1.msra.mxu0 %v312
      %524 = vmatprep.subr.mxu0 0.0
      %525 = vmatpush1.msra.mxu0 %v313
      %526 = vmatprep.subr.mxu0 0.0
      %527 = vmatpush1.msra.mxu0 %v314
      %528 = vmatprep.subr.mxu0 0.0
      %529 = vmatpush1.msra.mxu0 %v315
      %530 = vmatprep.subr.mxu0 0.0
      %531 = vmatpush1.msra.mxu0 %v316
      %532 = vmatprep.subr.mxu0 0.0
      %533 = vmatpush1.msra.mxu0 %v317
      %534 = vmatprep.subr.mxu0 0.0
      %535 = vmatpush1.msra.mxu0 %v318
      %536 = vmatprep.subr.mxu0 0.0
      %537 = vmatpush1.msra.mxu0 %v319
      %538 = vmatprep.subr.mxu0 0.0
      %539 = vmatpush1.msra.mxu0 %v320
      %540 = vmatprep.subr.mxu0 0.0
      %541 = vmatpush1.msra.mxu0 %v321
      %542 = vmatprep.subr.mxu0 0.0
      %543 = vmatpush1.msra.mxu0 %v322
      %544 = vmatprep.subr.mxu0 0.0
      %545 = vmatpush1.msra.mxu0 %v323
      %546 = vmatprep.subr.mxu0 0.0
      %547 = vmatpush1.msra.mxu0 0.0
      %548 = vmatprep.subr.mxu0 0.0
      %549 = vmatpush1.msra.mxu0 0.0
      %550 = vmatprep.subr.mxu0 0.0
      %551 = vmatpush1.msra.mxu0 0.0
      %552 = vmatprep.subr.mxu0 0.0
      %553 = vmatpush1.msra.mxu0 0.0
      %554 = vmatprep.subr.mxu0 0.0
      %555 = vmatpush1.msra.mxu0 0.0
      %556 = vmatprep.subr.mxu0 0.0
      %557 = vmatpush1.msra.mxu0 0.0
      %558 = vmatprep.subr.mxu0 0.0
      %559 = vmatpush1.msra.mxu0 0.0
      %560 = vmatprep.subr.mxu0 0.0
      %561 = vmatpush1.msra.mxu0 0.0
      %562 = vmatprep.subr.mxu0 0.0
      %563 = vmatpush1.msra.mxu0 0.0
      %564 = vmatprep.subr.mxu0 0.0
      %565 = vmatpush1.msra.mxu0 0.0
      %566 = vmatprep.subr.mxu0 0.0
      %567 = vmatpush1.msra.mxu0 0.0
      %568 = vmatprep.subr.mxu0 0.0
      %569 = vmatpush1.msra.mxu0 0.0
      %570 = vmatprep.subr.mxu0 0.0
      %571 = vmatpush1.msra.mxu0 0.0
      %572 = vmatprep.subr.mxu0 0.0
      %573 = vmatpush1.msra.mxu0 0.0
      %574 = vmatprep.subr.mxu0 0.0
      %575 = vmatpush1.msra.mxu0 0.0
      %576 = vmatprep.subr.mxu0 0.0
      %577 = vmatpush1.msra.mxu0 0.0
      %578 = vmatprep.mubr.f32.mxu0 0.0
      %579 = vmatmul.mubr.f32.gmra.mrb[0].mxu0 %v307
      %v580 = vpop.f32.mrb[0].mxu0
      %v581 = vadd.f32 %v511, %v580
      %v582 = vpop.f32.mrb[0].mxu0
      %583 = vdwg.mxu0
      %v584 = vxor.u32 %v581, 2147483648
      %v585 = vmul.f32 %v584, 1.442695
      %v586 = vpow.pop %v585
      %v587 = vadd.f32 %v586, 1.0
      %v588 = vrcp.pop %v587
      %v589 = vmul.f32 1.0, %v588
      %vm590 = vcmask 254976
      %591 = vst.msk [vmem:[#allocation4] sm:$0x3] %vm590, %v589
    $region21: #{channel_attention.1} parent=1 // pred_fallthru
      _
    // Predicated region
    $region22: #{channel_attention.1} parent=1 // pred_check
      _
    $region23: #{channel_attention.1} parent=1 // pred_check_branch
      %593 = sbr.rel (0) target = $region25
    $region24: #{channel_attention.1} parent=1 // pred_region
      %s595 = ssub.s32 32, 32
      %596 = vsyncadd [#allocation5], %s595
      %s598 = sshll.u32 [#allocation4], 4
      %s599 = int_to_ptr.vmem [resolvable:$true] %s598
      %601 = dma.vmem_to_hbm [thread:$0]  %s599, 32, %s3, [#allocation5]
    $region25: #{channel_attention.1} parent=1 // pred_fallthru
      _
    // Predicated region
    $region26: #{channel_attention.1} parent=1 // pred_check
      _
    $region27: #{channel_attention.1} parent=1 // pred_check_branch
      %603 = sbr.rel (0) target = $region29
    $region28: #{channel_attention.1} parent=1 // pred_region
      %604 = dma.done [#allocation5], 32
    $region29: #{channel_attention.1} parent=1 // pred_fallthru
      _
    %605 = vsyncpa [#allocation5], 1

</llo_original>
